<compile_context>
chip_gen: v6e
topology: v6e:2x2x1
jax: 0.10.0
libtpu: 0.0.40
codegen_flags: <defaults>
</compile_context>

<pallas_src>
import functools

import jax
import jax.numpy as jnp
from jax.experimental import pallas as pl
from jax.experimental.pallas import tpu as pltpu


def _round_up(v, m):
    return (v + m - 1) // m * m


# --------------------------------------------------------------------------
# Tiled matmul (+ optional relu epilogue)
# --------------------------------------------------------------------------
def _matmul_kernel(x_ref, w_ref, b_ref, o_ref, acc_ref, *, activation):
    @pl.when(pl.program_id(2) == 0)
    def _():
        acc_ref[...] = jnp.zeros_like(acc_ref)

    acc_ref[...] += jnp.dot(x_ref[...], w_ref[...],
                            preferred_element_type=jnp.float32)

    @pl.when(pl.program_id(2) == pl.num_programs(2) - 1)
    def _():
        y = acc_ref[...] + b_ref[...].astype(jnp.float32)
        if activation == "relu":
            y = jnp.maximum(y, 0.0)
        o_ref[...] = y.astype(o_ref.dtype)


def _matmul_kernel_single_k(x_ref, w_ref, b_ref, o_ref, *, activation):
    y = jnp.dot(x_ref[...], w_ref[...], preferred_element_type=jnp.float32)
    y = y + b_ref[...].astype(jnp.float32)
    if activation == "relu":
        y = jnp.maximum(y, 0.0)
    o_ref[...] = y.astype(o_ref.dtype)


def tiled_linear(x, w, b, activation=None, out_dtype=jnp.float32,
                 tm=128, tn=128, tk=512):
    """y = activation(x @ w + b), tiled/pipelined, bf16 MXU, f32 accumulate."""
    M, K = x.shape
    Kw, N = w.shape
    assert K == Kw, (x.shape, w.shape)

    # Clamp tiles to (padded) problem dims; keep sublane/lane alignment.
    if M <= tm:
        tm_eff, Mp = M, M
    else:
        tm_eff, Mp = tm, _round_up(M, tm)
    if N <= tn:
        tn_eff, Np = N, N
    else:
        tn_eff, Np = tn, _round_up(N, tn)
    if K <= tk:
        tk_eff, Kp = K, K
    else:
        tk_eff, Kp = tk, _round_up(K, tk)

    xp = x if (Mp == M and Kp == K) else jnp.pad(x, ((0, Mp - M), (0, Kp - K)))
    wp = w if (Kp == K and Np == N) else jnp.pad(w, ((0, Kp - K), (0, Np - N)))
    bp = b if Np == N else jnp.pad(b, ((0, Np - N),))

    x_bf = xp.astype(jnp.bfloat16)
    w_bf = wp.astype(jnp.bfloat16)
    b_f32 = bp.reshape(1, Np).astype(jnp.float32)
    n_k = Kp // tk_eff

    if n_k == 1:
        # No reduction axis -> skip the accumulator scratch entirely.
        kern = functools.partial(_matmul_kernel_single_k, activation=activation)
        out = pl.pallas_call(
            kern,
            out_shape=jax.ShapeDtypeStruct((Mp, Np), out_dtype),
            grid=(Mp // tm_eff, Np // tn_eff),
            in_specs=[
                pl.BlockSpec((tm_eff, tk_eff), lambda i, j: (i, 0)),
                pl.BlockSpec((tk_eff, tn_eff), lambda i, j: (0, j)),
                pl.BlockSpec((1, tn_eff), lambda i, j: (0, j)),
            ],
            out_specs=pl.BlockSpec((tm_eff, tn_eff), lambda i, j: (i, j)),
            compiler_params=pltpu.CompilerParams(
                dimension_semantics=("parallel", "parallel")),
        )(x_bf, w_bf, b_f32)
    else:
        kern = functools.partial(_matmul_kernel, activation=activation)
        out = pl.pallas_call(
            kern,
            out_shape=jax.ShapeDtypeStruct((Mp, Np), out_dtype),
            grid=(Mp // tm_eff, Np // tn_eff, n_k),
            in_specs=[
                pl.BlockSpec((tm_eff, tk_eff), lambda i, j, k: (i, k)),
                pl.BlockSpec((tk_eff, tn_eff), lambda i, j, k: (k, j)),
                pl.BlockSpec((1, tn_eff), lambda i, j, k: (0, j)),
            ],
            out_specs=pl.BlockSpec((tm_eff, tn_eff), lambda i, j, k: (i, j)),
            scratch_shapes=[pltpu.VMEM((tm_eff, tn_eff), jnp.float32)],
            compiler_params=pltpu.CompilerParams(
                dimension_semantics=("parallel", "parallel", "arbitrary")),
        )(x_bf, w_bf, b_f32)

    if Mp != M or Np != N:
        out = out[:M, :N]
    return out


# --------------------------------------------------------------------------
# Row-tiled log-softmax (full vocab in lanes per block)
# --------------------------------------------------------------------------
def _log_softmax_kernel(x_ref, o_ref):
    y = x_ref[...].astype(jnp.float32)
    m = jnp.max(y, axis=-1, keepdims=True)
    lse = m + jnp.log(jnp.sum(jnp.exp(y - m), axis=-1, keepdims=True))
    o_ref[...] = (y - lse).astype(o_ref.dtype)


def log_softmax_rows(x, rt=256):
    M, V = x.shape
    if M <= rt:
        rt_eff, Mp = M, M
    else:
        rt_eff, Mp = rt, _round_up(M, rt)
    xp = x if Mp == M else jnp.pad(x, ((0, Mp - M), (0, 0)))
    out = pl.pallas_call(
        _log_softmax_kernel,
        out_shape=jax.ShapeDtypeStruct((Mp, V), jnp.float32),
        grid=(Mp // rt_eff,),
        in_specs=[pl.BlockSpec((rt_eff, V), lambda i: (i, 0))],
        out_specs=pl.BlockSpec((rt_eff, V), lambda i: (i, 0)),
        compiler_params=pltpu.CompilerParams(dimension_semantics=("parallel",)),
    )(xp)
    return out[:M] if Mp != M else out


# --------------------------------------------------------------------------
# Mask encoder (per-channel linear + sigmoid) fused with x * mask
# Grid is (row_tiles, channels) with channels innermost so the x tile stays
# resident across channels (one HBM read of x per row tile).
# --------------------------------------------------------------------------
def _mask_kernel(x_ref, w_ref, b_ref, h_ref, *mask_refs):
    x = x_ref[...].astype(jnp.float32)                         # (rt, F)
    logits = jnp.dot(x.astype(jnp.bfloat16), w_ref[0],
                     preferred_element_type=jnp.float32)
    logits = logits + b_ref[0].astype(jnp.float32)             # (1, F) bcast
    mask = jax.nn.sigmoid(logits)
    h_ref[0] = (x * mask).astype(h_ref.dtype)
    if mask_refs:                                              # only if requested
        mask_refs[0][0] = mask.astype(mask_refs[0].dtype)


def mask_and_apply(x2d, w_mask, b_mask, return_masks=False, rt=256):
    R, F = x2d.shape
    C = w_mask.shape[0]
    if R <= rt:
        rt_eff, Rp = R, R
    else:
        rt_eff, Rp = rt, _round_up(R, rt)
    xp = x2d if Rp == R else jnp.pad(x2d, ((0, Rp - R), (0, 0)))

    h_spec = pl.BlockSpec((1, rt_eff, F), lambda r, c: (c, r, 0))
    if return_masks:
        out_shape = (jax.ShapeDtypeStruct((C, Rp, F), jnp.float32),
                     jax.ShapeDtypeStruct((C, Rp, F), jnp.float32))
        out_specs = (h_spec, h_spec)
    else:
        out_shape = jax.ShapeDtypeStruct((C, Rp, F), jnp.float32)
        out_specs = h_spec

    res = pl.pallas_call(
        _mask_kernel,
        out_shape=out_shape,
        grid=(Rp // rt_eff, C),
        in_specs=[
            pl.BlockSpec((rt_eff, F), lambda r, c: (r, 0)),
            pl.BlockSpec((1, F, F), lambda r, c: (c, 0, 0)),
            pl.BlockSpec((1, 1, F), lambda r, c: (c, 0, 0)),
        ],
        out_specs=out_specs,
        compiler_params=pltpu.CompilerParams(
            dimension_semantics=("parallel", "parallel")),
    )(xp, w_mask.astype(jnp.bfloat16), b_mask.astype(jnp.float32))

    if return_masks:
        h_stack, m_stack = res
    else:
        h_stack, m_stack = res, None
    if Rp != R:
        h_stack = h_stack[:, :R, :]
        if m_stack is not None:
            m_stack = m_stack[:, :R, :]
    return h_stack, m_stack


# --------------------------------------------------------------------------
# Joiner: logits[n] = tanh(am[n,:,None,:] + lm[n,None,:,:]) @ W_out + b_out
# tiled over T; U padded to sublane multiple so the flatten is tile-aligned.
# --------------------------------------------------------------------------
def _joiner_kernel(am_ref, lm_ref, w_ref, b_ref, o_ref):
    a = am_ref[0].astype(jnp.float32)                          # (tt, J)
    l = lm_ref[0].astype(jnp.float32)                          # (Up, J)
    tt, J = a.shape
    Up = l.shape[0]
    z = jnp.tanh(a[:, None, :] + l[None, :, :])                # (tt, Up, J) f32
    z2 = z.reshape(tt * Up, J).astype(jnp.bfloat16)            # tile-aligned (Up%8==0)
    logits = jnp.dot(z2, w_ref[...], preferred_element_type=jnp.float32)
    logits = logits + b_ref[...].astype(jnp.float32)
    o_ref[0] = logits.reshape(tt, Up, -1).astype(o_ref.dtype)


def joiner(am_j, lm_j, w_out, b_out, tt=64, out_dtype=jnp.bfloat16):
    N, T, J = am_j.shape
    _, U, _ = lm_j.shape
    V = w_out.shape[1]

    if T <= tt:
        tt_eff, Tp = T, T
    else:
        tt_eff, Tp = tt, _round_up(T, tt)
    Up = _round_up(U, 8)

    amp = am_j if Tp == T else jnp.pad(am_j, ((0, 0), (0, Tp - T), (0, 0)))
    lmp = lm_j if Up == U else jnp.pad(lm_j, ((0, 0), (0, Up - U), (0, 0)))

    out = pl.pallas_call(
        _joiner_kernel,
        out_shape=jax.ShapeDtypeStruct((N, Tp, Up, V), out_dtype),
        grid=(N, Tp // tt_eff),
        in_specs=[
            pl.BlockSpec((1, tt_eff, J), lambda n, t: (n, t, 0)),
            pl.BlockSpec((1, Up, J), lambda n, t: (n, 0, 0)),
            pl.BlockSpec((J, V), lambda n, t: (0, 0)),
            pl.BlockSpec((1, V), lambda n, t: (0, 0)),
        ],
        out_specs=pl.BlockSpec((1, tt_eff, Up, V), lambda n, t: (n, t, 0, 0)),
        compiler_params=pltpu.CompilerParams(
            dimension_semantics=("parallel", "parallel")),
    )(amp.astype(jnp.bfloat16), lmp.astype(jnp.bfloat16),
      w_out.astype(jnp.bfloat16), b_out.reshape(1, V).astype(jnp.float32))

    if Tp != T or Up != U:
        out = out[:, :T, :U, :]
    return out


# --------------------------------------------------------------------------
# SURT forward (hot path)
# --------------------------------------------------------------------------
def surt_forward(params, x, x_lens, sos_y_padded, return_masks=False):
    B, T, F = x.shape
    C = params["w_mask"].shape[0]
    V = params["w_ctc"].shape[1]
    J = params["w_joiner_enc"].shape[1]

    x2d = x.reshape(B * T, F).astype(jnp.float32)

    # ---- mask encoder + mask application (fused, row-tiled, channel inner) --
    # TODO(synk): the real DPRNN mask-encoder stack is not translated; a
    # per-channel linear + sigmoid stands in for it.
    h_stack, m_stack = mask_and_apply(
        x2d, params["w_mask"], params["b_mask"], return_masks=return_masks)
    h = h_stack.reshape(C * B, T, F)                     # == torch.cat(x_masked, 0)
    x_masked = [h_stack[c].reshape(B, T, F) for c in range(C)]
    masks = None if m_stack is None else [m_stack[c].reshape(B, T, F) for c in range(C)]
    h_lens = jnp.concatenate([x_lens] * C, axis=0)

    N = C * B
    M = N * T

    # ---- encoder stand-in (single linear + relu) ----------------------------
    # TODO(synk): the real Zipformer encoder stack is not translated; this
    # linear+relu stands in for EncoderInterface.__call__.
    enc2d = tiled_linear(h.reshape(M, F), params["w_enc"], params["b_enc"],
                         activation="relu")
    E = enc2d.shape[1]
    encoder_out = enc2d.reshape(N, T, E)
    # joint_encoder_layer is None -> identity

    # ---- fused projections off encoder_out: [ctc | simple_am | joiner_enc] --
    w_enc_fused = jnp.concatenate(
        [params["w_ctc"], params["w_am"], params["w_joiner_enc"]], axis=1)
    b_enc_fused = jnp.concatenate(
        [params["b_ctc"], params["b_am"], params["b_joiner_enc"]], axis=0)
    enc_proj = tiled_linear(enc2d, w_enc_fused, b_enc_fused)
    ctc_logits = enc_proj[:, :V]
    am = enc_proj[:, V:2 * V].reshape(N, T, V)
    am_j = enc_proj[:, 2 * V:2 * V + J].reshape(N, T, J)

    # ctc_output = Dropout(eval: identity) -> Linear -> LogSoftmax
    ctc_output = log_softmax_rows(ctc_logits).reshape(N, T, V)

    # ---- decoder (embedding lookup stand-in, glue) ---------------------------
    # TODO(synk): the real stateless Decoder (embedding + context conv) is not
    # translated; a plain embedding lookup stands in.
    decoder_out = jnp.take(params["emb"], sos_y_padded, axis=0)     # (N, U, D)
    U = sos_y_padded.shape[1]
    D = decoder_out.shape[-1]

    # ---- fused projections off decoder_out: [simple_lm | joiner_dec] ---------
    w_dec_fused = jnp.concatenate([params["w_lm"], params["w_joiner_dec"]], axis=1)
    b_dec_fused = jnp.concatenate([params["b_lm"], params["b_joiner_dec"]], axis=0)
    dec_proj = tiled_linear(decoder_out.reshape(N * U, D), w_dec_fused, b_dec_fused)
    lm = dec_proj[:, :V].reshape(N, U, V)
    lm_j = dec_proj[:, V:V + J].reshape(N, U, J)

    # ---- joiner (unpruned; k2 pruning untranslatable) -------------------------
    joiner_logits = joiner(am_j, lm_j, params["w_joiner_out"], params["b_joiner_out"])

    # TODO(synk): k2.rnnt_loss_smoothed / get_rnnt_prune_ranges / do_rnnt_pruning /
    # rnnt_loss_pruned / ctc_graph / DenseFsaVec / ctc_loss are FSA-based dynamic
    # programs with no Pallas equivalent; the dense tensors below feed them.
    return dict(
        x_masked=x_masked,
        masks=masks,
        h=h,
        h_lens=h_lens,
        encoder_out=encoder_out,
        ctc_output=ctc_output,
        am=am,
        lm=lm,
        joiner_logits=joiner_logits,
    )


# --------------------------------------------------------------------------
# Deterministic parameter construction (synthetic, no checkpoint)
# --------------------------------------------------------------------------
def make_params(key, *, F, num_channels, encoder_dim, decoder_dim, joiner_dim,
                vocab_size):
    ks = jax.random.split(key, 10)
    s = 0.1
    return dict(
        # mask encoder, stored per-channel: (C, F, F) / (C, 1, F)
        w_mask=s * jax.random.normal(ks[0], (num_channels, F, F), jnp.float32),
        b_mask=s * jax.random.normal(ks[1], (num_channels, 1, F), jnp.float32),
        # encoder stand-in
        w_enc=s * jax.random.normal(ks[2], (F, encoder_dim), jnp.float32),
        b_enc=jnp.zeros((encoder_dim,), jnp.float32),
        # ctc_output
        w_ctc=s * jax.random.normal(ks[3], (encoder_dim, vocab_size), jnp.float32),
        b_ctc=jnp.zeros((vocab_size,), jnp.float32),
        # decoder embedding (stateless predictor stand-in)
        emb=s * jax.random.normal(ks[4], (vocab_size, decoder_dim), jnp.float32),
        # simple projections
        w_am=s * jax.random.normal(ks[5], (encoder_dim, vocab_size), jnp.float32),
        b_am=jnp.zeros((vocab_size,), jnp.float32),
        w_lm=s * jax.random.normal(ks[6], (decoder_dim, vocab_size), jnp.float32),
        b_lm=jnp.zeros((vocab_size,), jnp.float32),
        # joiner
        w_joiner_enc=s * jax.random.normal(ks[7], (encoder_dim, joiner_dim), jnp.float32),
        b_joiner_enc=jnp.zeros((joiner_dim,), jnp.float32),
        w_joiner_dec=s * jax.random.normal(ks[8], (decoder_dim, joiner_dim), jnp.float32),
        b_joiner_dec=jnp.zeros((joiner_dim,), jnp.float32),
        w_joiner_out=s * jax.random.normal(ks[9], (joiner_dim, vocab_size), jnp.float32),
        b_joiner_out=jnp.zeros((vocab_size,), jnp.float32),
    )


if __name__ == "__main__":
    # Small but lane/sublane-friendly shapes (last dims multiples of 8/128 keep
    # stores dense; the wrappers pad/slice for arbitrary sizes anyway).
    B, T, F = 2, 48, 64
    num_channels = 2
    encoder_dim = 128
    decoder_dim = 128
    joiner_dim = 128
    vocab_size = 128
    U = 8
    blank_id = 0

    key = jax.random.PRNGKey(0)
    k_x, k_y, k_p = jax.random.split(key, 3)

    params = make_params(
        k_p, F=F, num_channels=num_channels, encoder_dim=encoder_dim,
        decoder_dim=decoder_dim, joiner_dim=joiner_dim, vocab_size=vocab_size,
    )

    x = jax.random.normal(k_x, (B, T, F), jnp.float32)
    x_lens = jnp.full((B,), T, jnp.int32)
    # sos-prefixed padded labels, one row per (channel, utterance): (C*B, U)
    labels = jax.random.randint(k_y, (num_channels * B, U - 1), 1, vocab_size, jnp.int32)
    sos_y_padded = jnp.concatenate(
        [jnp.full((num_channels * B, 1), blank_id, jnp.int32), labels], axis=1)

    out = surt_forward(params, x, x_lens, sos_y_padded)
    jax.block_until_ready(out)

    N = num_channels * B
    assert out["h"].shape == (N, T, F)
    assert out["h_lens"].shape == (N,)
    assert out["encoder_out"].shape == (N, T, encoder_dim)
    assert out["ctc_output"].shape == (N, T, vocab_size)
    assert out["am"].shape == (N, T, vocab_size)
    assert out["lm"].shape == (N, U, vocab_size)
    assert out["joiner_logits"].shape == (N, T, U, vocab_size)
    assert len(out["x_masked"]) == num_channels
    assert out["x_masked"][0].shape == (B, T, F)

    print("KERNEL_OK")
</pallas_src>

<mosaic_0001>
module attributes {stable_mosaic.version = 11 : i64} {
  func.func @_mask_kernel(%arg0: i32, %arg1: i32, %arg2: memref<96x64xf32, #tpu.memory_space<vmem>>, %arg3: memref<1x64x64xbf16, #tpu.memory_space<vmem>>, %arg4: memref<1x1x64xf32, #tpu.memory_space<vmem>>, %arg5: memref<1x96x64xf32, #tpu.memory_space<vmem>>) attributes {dimension_semantics = [#tpu.dimension_semantics<parallel>, #tpu.dimension_semantics<parallel>], iteration_bounds = array<i64: 1, 2>, scalar_prefetch = 0 : i64, scratch_operands = 0 : i64, tpu.core_type = #tpu.core_type<tc>, window_params = [{transform_indices = @transform_0, window_bounds = array<i64: 96, 64>}, {transform_indices = @transform_1, window_bounds = array<i64: 1, 64, 64>}, {transform_indices = @transform_2, window_bounds = array<i64: 1, 1, 64>}, {transform_indices = @transform_3, window_bounds = array<i64: 1, 96, 64>}]} {
    %c0 = arith.constant 0 : index
    %c0_0 = arith.constant 0 : index
    %0 = vector.load %arg2[%c0, %c0_0] : memref<96x64xf32, #tpu.memory_space<vmem>>, vector<96x64xf32>
    %1 = arith.truncf %0 : vector<96x64xf32> to vector<96x64xbf16>
    %c0_1 = arith.constant 0 : index
    %c0_2 = arith.constant 0 : index
    %c0_3 = arith.constant 0 : index
    %2 = vector.load %arg3[%c0_1, %c0_2, %c0_3] : memref<1x64x64xbf16, #tpu.memory_space<vmem>>, vector<1x64x64xbf16>
    %3 = vector.shape_cast %2 : vector<1x64x64xbf16> to vector<64x64xbf16>
    %cst = arith.constant dense<0.000000e+00> : vector<96x64xf32>
    %4 = tpu.matmul %1, %3, %cst {dimension_numbers = #tpu.dot_dimension_numbers<[1], [0], [0], [1], [0, 0, 1, 1], [], []>} : vector<96x64xbf16>, vector<64x64xbf16>, vector<96x64xf32> -> vector<96x64xf32>
    %c0_4 = arith.constant 0 : index
    %c0_5 = arith.constant 0 : index
    %c0_6 = arith.constant 0 : index
    %5 = vector.load %arg4[%c0_4, %c0_5, %c0_6] : memref<1x1x64xf32, #tpu.memory_space<vmem>>, vector<1x1x64xf32>
    %6 = vector.shape_cast %5 : vector<1x1x64xf32> to vector<1x64xf32>
    %7 = vector.broadcast %6 : vector<1x64xf32> to vector<96x64xf32>
    %8 = arith.addf %4, %7 : vector<96x64xf32>
    %9 = arith.negf %8 : vector<96x64xf32>
    %10 = math.exp %9 : vector<96x64xf32>
    %cst_7 = arith.constant 1.000000e+00 : f32
    %11 = vector.broadcast %cst_7 : f32 to vector<96x64xf32>
    %12 = arith.addf %11, %10 : vector<96x64xf32>
    %13 = arith.divf %11, %12 : vector<96x64xf32>
    %14 = arith.mulf %0, %13 : vector<96x64xf32>
    %c0_8 = arith.constant 0 : index
    %c0_9 = arith.constant 0 : index
    %c0_10 = arith.constant 0 : index
    %15 = vector.load %arg5[%c0_8, %c0_9, %c0_10] : memref<1x96x64xf32, #tpu.memory_space<vmem>>, vector<1x96x64xf32>
    %16 = vector.shape_cast %15 : vector<1x96x64xf32> to vector<96x64xf32>
    %17 = vector.shape_cast %14 : vector<96x64xf32> to vector<1x96x64xf32>
    tpu.vector_store %arg5[%c0_8, %c0_9, %c0_10], %17 {strides = array<i32>} : memref<1x96x64xf32, #tpu.memory_space<vmem>>, vector<1x96x64xf32>,
    return
  }
  func.func @transform_0(%arg0: i32, %arg1: i32) -> (i32, i32) {
    %c0_i32 = arith.constant 0 : i32
    %c0_i32_0 = arith.constant 0 : i32
    return %arg0, %c0_i32 : i32, i32
  }
  func.func @transform_1(%arg0: i32, %arg1: i32) -> (i32, i32, i32) {
    %c0_i32 = arith.constant 0 : i32
    %c0_i32_0 = arith.constant 0 : i32
    %c0_i32_1 = arith.constant 0 : i32
    return %arg1, %c0_i32, %c0_i32_0 : i32, i32, i32
  }
  func.func @transform_2(%arg0: i32, %arg1: i32) -> (i32, i32, i32) {
    %c0_i32 = arith.constant 0 : i32
    %c0_i32_0 = arith.constant 0 : i32
    %c0_i32_1 = arith.constant 0 : i32
    return %arg1, %c0_i32, %c0_i32_0 : i32, i32, i32
  }
  func.func @transform_3(%arg0: i32, %arg1: i32) -> (i32, i32, i32) {
    %c0_i32 = arith.constant 0 : i32
    %c0_i32_0 = arith.constant 0 : i32
    return %arg1, %arg0, %c0_i32 : i32, i32, i32
  }
}

</mosaic_0001>

<llo_original>
// kernel: tpu_custom_call.1
$region0: #{tpu_custom_call.1}
  #allocation0 [shape = 'u32[]', space=smem, size = 0x4, offset = 0x4, fixed_abs, tag = 'smem constant byte address 0x4 - core index']
  #allocation1 [shape = 'u32[144,128]{1,0:T(1,128)}', space=vmem, size = 0x12000, scoped, tag = 'internal scratch']
  %s0 = inlined_call_operand.vmem [shape: f32[96,64], index: 0, kind: input, shape index: {}]
  %s1 = inlined_call_operand.vmem [shape: bf16[2,64,64], index: 1, kind: input, shape index: {}]
  %s2 = inlined_call_operand.vmem [shape: f32[2,1,64], index: 2, kind: input, shape index: {}]
  %s3 = inlined_call_operand.vmem [shape: f32[2,96,64], index: 3, kind: output, shape index: {}]
  %s4 = sld [smem:[#allocation0]]
  $region45: #{tpu_custom_call.1} parent=0
    _
  %s6 = ssub.s32 1, %s4
  %s7 = scalar_select 0, %s6, %s4
  loop: start=0, step=1, limit=4
  $region2: #{tpu_custom_call.1} parent=0 // loop_pre_header
    _
  $region3: #{tpu_custom_call.1} parent=0 // loop_header
    %s9 = sphi 0, %s13
    %p10 = scmp.ge.s32.totalorder %s9, 4
    %s16 = sphi 0, %s28
    %s17 = sphi 0, %s24
    %s18 = sphi 0, %s16
    %s19 = sphi 0, %s17
    %s20 = sphi 0, %s18
    %s21 = sphi 0, %s19
    %s31 = sphi 0, %s33
    %s34 = sphi 0, %s31
    %s35 = sphi 0, %s34
    %s51 = sphi 0, %s35
    %s57 = sphi 0, %s59
    %s60 = sphi 0, %s57
    %s61 = sphi 0, %s60
    %s77 = sphi 0, %s61
    %s83 = sphi 0, %s85
    %s86 = sphi 0, %s83
    %s87 = sphi 0, %s86
    %s103 = sphi 0, %s87
    %s111 = sphi 0, %s113
    %s114 = sphi 0, %s111
    %s115 = sphi 0, %s114
    %s131 = sphi 0, %s115
  $region4: #{tpu_custom_call.1} parent=0 // loop_header_branch
    %12 = sbr.rel (%p10) target = $region8
  $region5: #{tpu_custom_call.1} parent=0 // loop_body
    %s14 = ssub.s32 %s9, 1
    %s15 = ssub.s32 %s9, 2
    %s22 = sadd.s32 1, %s17
    %p23 = scmp.ge.s32.totalorder %s22, 2
    %s24 = scalar_select %p23, 0, %s22
    %s25 = sadd.s32 1, %s16
    %s26 = scalar_select %p23, %s25, %s16
    %p27 = scmp.ge.s32.totalorder %s26, 1
    %s28 = scalar_select %p27, 0, %s26
    %s29 = ssub.s32 %s16, %s28
    %p30 = scmp.eq.s32.totalorder %s29, 0
    %s32 = sadd.s32 %s31, 1
    %s33 = scalar_select %p30, %s31, %s32
    %p36 = pneg %p30
    %p37 = scmp.eq.s32.totalorder %s9, 1
    %p38 = por %p36, %p37
    %p39 = scmp.ne.s32.totalorder %s31, %s34
    %p40 = scmp.eq.s32.totalorder %s9, 0
    %p41 = por %p39, %p40
    %p42 = scmp.ne.s32.totalorder %s31, %s34
    %p43 = scmp.eq.s32.totalorder %s14, 1
    %p44 = por %p42, %p43
    %p45 = scmp.ne.s32.totalorder %s34, %s35
    %p46 = scmp.eq.s32.totalorder %s14, 0
    %p47 = por %p45, %p46
    %p48 = scmp.ne.s32.totalorder %s34, %s35
    %p49 = scmp.eq.s32.totalorder %s15, 1
    %p50 = por %p48, %p49
    %p52 = scmp.ne.s32.totalorder %s35, %s51
    %p53 = scmp.eq.s32.totalorder %s15, 0
    %p54 = por %p52, %p53
    %s55 = ssub.s32 %s17, %s24
    %p56 = scmp.eq.s32.totalorder %s55, 0
    %s58 = sadd.s32 %s57, 1
    %s59 = scalar_select %p56, %s57, %s58
    %p62 = pneg %p56
    %p63 = scmp.eq.s32.totalorder %s9, 1
    %p64 = por %p62, %p63
    %p65 = scmp.ne.s32.totalorder %s57, %s60
    %p66 = scmp.eq.s32.totalorder %s9, 0
    %p67 = por %p65, %p66
    %p68 = scmp.ne.s32.totalorder %s57, %s60
    %p69 = scmp.eq.s32.totalorder %s14, 1
    %p70 = por %p68, %p69
    %p71 = scmp.ne.s32.totalorder %s60, %s61
    %p72 = scmp.eq.s32.totalorder %s14, 0
    %p73 = por %p71, %p72
    %p74 = scmp.ne.s32.totalorder %s60, %s61
    %p75 = scmp.eq.s32.totalorder %s15, 1
    %p76 = por %p74, %p75
    %p78 = scmp.ne.s32.totalorder %s61, %s77
    %p79 = scmp.eq.s32.totalorder %s15, 0
    %p80 = por %p78, %p79
    %s81 = ssub.s32 %s17, %s24
    %p82 = scmp.eq.s32.totalorder %s81, 0
    %s84 = sadd.s32 %s83, 1
    %s85 = scalar_select %p82, %s83, %s84
    %p88 = pneg %p82
    %p89 = scmp.eq.s32.totalorder %s9, 1
    %p90 = por %p88, %p89
    %p91 = scmp.ne.s32.totalorder %s83, %s86
    %p92 = scmp.eq.s32.totalorder %s9, 0
    %p93 = por %p91, %p92
    %p94 = scmp.ne.s32.totalorder %s83, %s86
    %p95 = scmp.eq.s32.totalorder %s14, 1
    %p96 = por %p94, %p95
    %p97 = scmp.ne.s32.totalorder %s86, %s87
    %p98 = scmp.eq.s32.totalorder %s14, 0
    %p99 = por %p97, %p98
    %p100 = scmp.ne.s32.totalorder %s86, %s87
    %p101 = scmp.eq.s32.totalorder %s15, 1
    %p102 = por %p100, %p101
    %p104 = scmp.ne.s32.totalorder %s87, %s103
    %p105 = scmp.eq.s32.totalorder %s15, 0
    %p106 = por %p104, %p105
    %s107 = ssub.s32 %s17, %s24
    %s108 = ssub.s32 %s16, %s28
    %s109 = sor.u32 %s107, %s108
    %p110 = scmp.eq.s32.totalorder %s109, 0
    %s112 = sadd.s32 %s111, 1
    %s113 = scalar_select %p110, %s111, %s112
    %p116 = pneg %p110
    %p117 = scmp.eq.s32.totalorder %s9, 1
    %p118 = por %p116, %p117
    %p119 = scmp.ne.s32.totalorder %s111, %s114
    %p120 = scmp.eq.s32.totalorder %s9, 0
    %p121 = por %p119, %p120
    %p122 = scmp.ne.s32.totalorder %s111, %s114
    %p123 = scmp.eq.s32.totalorder %s14, 1
    %p124 = por %p122, %p123
    %p125 = scmp.ne.s32.totalorder %s114, %s115
    %p126 = scmp.eq.s32.totalorder %s14, 0
    %p127 = por %p125, %p126
    %p128 = scmp.ne.s32.totalorder %s114, %s115
    %p129 = scmp.eq.s32.totalorder %s15, 1
    %p130 = por %p128, %p129
    %p132 = scmp.ne.s32.totalorder %s115, %s131
    %p133 = scmp.eq.s32.totalorder %s15, 0
    %p134 = por %p132, %p133
    %p135 = scmp.le.s32.totalorder 1, %s9
    %p136 = scmp.lt.s32.totalorder %s9, 3
    %p137 = pnand %p135, %p136
    %p138 = pneg %p137
    // Predicated region
    $region9: #{tpu_custom_call.1} parent=5 // pred_check
      _
    $region10: #{tpu_custom_call.1} parent=5 // pred_check_branch
      %140 = sbr.rel (%p137) target = $region12
    $region11: #{tpu_custom_call.1} parent=5 // pred_region
      %s141 = ssub.s32 %s9, 1
      // Predicated region
      $region13: #{tpu_custom_call.1} parent=11 // pred_check
        %p142 = pneg %p47
      $region14: #{tpu_custom_call.1} parent=11 // pred_check_branch
        %144 = sbr.rel (%p142) target = $region16
      $region15: #{tpu_custom_call.1} parent=11 // pred_region
        %s145 = smul.u32 12, %s18
        %p146 = scmp.lt.s32.totalorder %s145, 11
        %s147 = scalar_select %p146, %s145, 11
        %s148 = smul.addr %s147, 8
        %s149 = scalar_lea.vmem %s0, %s148
        %s150 = smul.u32 12, %s18
      $region16: #{tpu_custom_call.1} parent=11 // pred_fallthru
        _
    $region12: #{tpu_custom_call.1} parent=5 // pred_fallthru
      _
    %p151 = scmp.lt.s32.totalorder %s9, 2
    // Predicated region
    $region17: #{tpu_custom_call.1} parent=5 // pred_check
      %p152 = pneg %p151
    $region18: #{tpu_custom_call.1} parent=5 // pred_check_branch
      %154 = sbr.rel (%p152) target = $region20
    $region19: #{tpu_custom_call.1} parent=5 // pred_region
      // Predicated region
      $region21: #{tpu_custom_call.1} parent=19 // pred_check
        %p155 = pneg %p67
      $region22: #{tpu_custom_call.1} parent=19 // pred_check_branch
        %157 = sbr.rel (%p155) target = $region24
      $region23: #{tpu_custom_call.1} parent=19 // pred_region
        %p158 = scmp.lt.s32.totalorder %s17, 1
        %s159 = scalar_select %p158, %s17, 1
        %s160 = smul.addr %s159, 8
        %s161 = smul.addr %s160, 4
        %s162 = scalar_lea.vmem %s1, %s161
      $region24: #{tpu_custom_call.1} parent=19 // pred_fallthru
        _
      // Predicated region
      $region25: #{tpu_custom_call.1} parent=19 // pred_check
        %p163 = pneg %p93
      $region26: #{tpu_custom_call.1} parent=19 // pred_check_branch
        %165 = sbr.rel (%p163) target = $region28
      $region27: #{tpu_custom_call.1} parent=19 // pred_region
        %p166 = scmp.lt.s32.totalorder %s17, 1
        %s167 = scalar_select %p166, %s17, 1
        %s168 = scalar_lea.vmem %s2, %s167
      $region28: #{tpu_custom_call.1} parent=19 // pred_fallthru
        _
    $region20: #{tpu_custom_call.1} parent=5 // pred_fallthru
      _
    %p169 = scmp.le.s32.totalorder 1, %s9
    %p170 = scmp.lt.s32.totalorder %s9, 3
    %p171 = pnand %p169, %p170
    %p172 = pneg %p171
    // Predicated region
    $region29: #{tpu_custom_call.1} parent=5 // pred_check
      _
    $region30: #{tpu_custom_call.1} parent=5 // pred_check_branch
      %174 = sbr.rel (%p171) target = $region32
    $region31: #{tpu_custom_call.1} parent=5 // pred_region
      %s175 = ssub.s32 %s9, 1
      %s176 = smul.u32 12, %s18
      %p177 = scmp.lt.s32.totalorder %s176, 11
      %s178 = scalar_select %p177, %s176, 11
      %s179 = smul.addr %s178, 8
      %s180 = scalar_lea.vmem %s0, %s179
      %p181 = pneg %p47
      %p182 = pneg %p44
      %p183 = scmp.lt.s32.totalorder %s19, 1
      %s184 = scalar_select %p183, %s19, 1
      %s185 = smul.addr %s184, 8
      %s186 = smul.addr %s185, 4
      %s187 = scalar_lea.vmem %s1, %s186
      %p188 = pneg %p73
      %p189 = pneg %p70
      %p190 = scmp.lt.s32.totalorder %s19, 1
      %s191 = scalar_select %p190, %s19, 1
      %s192 = scalar_lea.vmem %s2, %s191
      %p193 = pneg %p99
      %p194 = pneg %p96
      %p195 = pneg %p127
      %p196 = pneg %p124
      %s197 = smul.u32 12, %s18
      %p198 = scmp.lt.s32.totalorder %s19, 1
      %s199 = scalar_select %p198, %s19, 1
      %p200 = scmp.lt.s32.totalorder %s197, 11
      %s201 = scalar_select %p200, %s197, 11
      %s202 = smul.addr %s199, 12
      %s203 = sadd.s32 %s201, %s202
      %s204 = smul.addr %s203, 8
      %s205 = scalar_lea.vmem %s3, %s204
      %s206 = smul.u32 12, %s18
      %p207 = scmp.lt.s32.totalorder %s206, 11
      %s208 = scalar_select %p207, %s206, 11
      %s209 = smul.addr %s208, 8
      %s210 = scalar_lea.vmem %s0, %s209
      %s211 = smul.u32 12, %s18
      %p212 = scmp.lt.s32.totalorder %s19, 1
      %s213 = scalar_select %p212, %s19, 1
      %s214 = smul.addr %s213, 8
      %s215 = smul.addr %s214, 4
      %s216 = scalar_lea.vmem %s1, %s215
      %p217 = scmp.lt.s32.totalorder %s19, 1
      %s218 = scalar_select %p217, %s19, 1
      %s219 = scalar_lea.vmem %s2, %s218
      %s220 = smul.u32 12, %s18
      %p221 = scmp.lt.s32.totalorder %s19, 1
      %s222 = scalar_select %p221, %s19, 1
      %p223 = scmp.lt.s32.totalorder %s220, 11
      %s224 = scalar_select %p223, %s220, 11
      %s225 = smul.addr %s222, 12
      %s226 = sadd.s32 %s224, %s225
      %s227 = smul.addr %s226, 8
      %s228 = scalar_lea.vmem %s3, %s227
      %s229 = smul.u32 12, %s18
      %v231 = vld [vmem:[%s210] sm:$0xff]
      %v232 = vld [vmem:[%s210 + $0x8] sm:$0xff]
      %v233 = vld [vmem:[%s210 + $0x10] sm:$0xff]
      %v234 = vld [vmem:[%s210 + $0x18] sm:$0xff]
      %v235 = vld [vmem:[%s210 + $0x20] sm:$0xff]
      %v236 = vld [vmem:[%s210 + $0x28] sm:$0xff]
      %v237 = vld [vmem:[%s210 + $0x30] sm:$0xff]
      %v238 = vld [vmem:[%s210 + $0x38] sm:$0xff]
      %v239 = vld [vmem:[%s210 + $0x40] sm:$0xff]
      %v240 = vld [vmem:[%s210 + $0x48] sm:$0xff]
      %v241 = vld [vmem:[%s210 + $0x50] sm:$0xff]
      %v242 = vld [vmem:[%s210 + $0x58] sm:$0xff]
      %v243 = vpack.c.bf16 %v232, %v231
      %v244 = vpack.c.bf16 %v234, %v233
      %v245 = vpack.c.bf16 %v236, %v235
      %v246 = vpack.c.bf16 %v238, %v237
      %v247 = vpack.c.bf16 %v240, %v239
      %v248 = vpack.c.bf16 %v242, %v241
      %v249 = vld [vmem:[%s216] sm:$0xf]
      %v250 = vld [vmem:[%s216 + $0x4] sm:$0xf]
      %v251 = vld [vmem:[%s216 + $0x8] sm:$0xf]
      %v252 = vld [vmem:[%s216 + $0xc] sm:$0xf]
      %v253 = vld [vmem:[%s216 + $0x10] sm:$0xf]
      %v254 = vld [vmem:[%s216 + $0x14] sm:$0xf]
      %v255 = vld [vmem:[%s216 + $0x18] sm:$0xf]
      %v256 = vld [vmem:[%s216 + $0x1c] sm:$0xf]
      %v257 = vld [vmem:[%s219] sm:$0x1]
      %v259 = vlaneseq
      %v260 = vshrl.u32 %v259, 7
      %v261 = vsub.s32 0, %v260
      %v262 = vrot.slane %v257, %v261
      %v272 = vunpack.c.l.b16 %v249
      %v273 = vunpack.c.l.b16 %v250
      %v274 = vunpack.c.l.b16 %v251
      %v275 = vunpack.c.l.b16 %v252
      %v276 = vunpack.c.l.b16 %v253
      %v277 = vunpack.c.l.b16 %v254
      %v278 = vunpack.c.l.b16 %v255
      %v279 = vunpack.c.l.b16 %v256
      %v280 = vpack.c.b16 %v273, %v272
      %v281 = vpack.c.b16 %v275, %v274
      %v282 = vpack.c.b16 %v277, %v276
      %v283 = vpack.c.b16 %v279, %v278
      %vm288 = vcmask 523264
      %v290 = vsel %vm288, %v243, 0
      %v293 = vsel %vm288, %v244, 0
      %v296 = vsel %vm288, %v245, 0
      %v299 = vsel %vm288, %v246, 0
      %v302 = vsel %vm288, %v247, 0
      %v305 = vsel %vm288, %v248, 0
      %307 = vmatprep.subr.bf16.mxu0 0
      %308 = vmatpush1.bf16.msra.mxu0 0
      %309 = vmatprep.subr.bf16.mxu0 0
      %310 = vmatpush1.bf16.msra.mxu0 0
      %311 = vmatprep.subr.bf16.mxu0 0
      %312 = vmatpush1.bf16.msra.mxu0 0
      %313 = vmatprep.subr.bf16.mxu0 0
      %314 = vmatpush1.bf16.msra.mxu0 0
      %315 = vmatprep.subr.bf16.mxu0 0
      %316 = vmatpush1.bf16.msra.mxu0 %v283
      %317 = vmatprep.subr.bf16.mxu0 0
      %318 = vmatpush1.bf16.msra.mxu0 %v282
      %319 = vmatprep.subr.bf16.mxu0 0
      %320 = vmatpush1.bf16.msra.mxu0 %v281
      %321 = vmatprep.subr.bf16.mxu0 0
      %322 = vmatpush1.bf16.msra.mxu0 %v280
      %323 = vmatprep.subr.bf16.mxu0 0
      %324 = vmatpush2.bf16.msra.mxu0 0
      %325 = vmatprep.subr.bf16.mxu0 0
      %326 = vmatpush2.bf16.msra.mxu0 0
      %327 = vmatprep.subr.bf16.mxu0 0
      %328 = vmatpush2.bf16.msra.mxu0 0
      %329 = vmatprep.subr.bf16.mxu0 0
      %330 = vmatpush2.bf16.msra.mxu0 0
      %331 = vmatprep.subr.bf16.mxu0 0
      %332 = vmatpush2.bf16.msra.mxu0 0
      %333 = vmatprep.subr.bf16.mxu0 0
      %334 = vmatpush2.bf16.msra.mxu0 0
      %335 = vmatprep.subr.bf16.mxu0 0
      %336 = vmatpush2.bf16.msra.mxu0 0
      %337 = vmatprep.subr.bf16.mxu0 0
      %338 = vmatpush2.bf16.msra.mxu0 0
      %339 = vmatprep.mubr.bf16.mxu0 0
      %340 = vmatmul.mubr.bf16.gmra.mxu0 %v290
      %v341 = vpop.f32.mrf.mxu0
      %v342 = vadd.f32 %v262, %v341
      %v343 = vpop.f32.mrf.mxu0
      %v344 = vpop.f32.mrf.mxu0
      %v345 = vadd.f32 %v262, %v344
      %v346 = vpop.f32.mrf.mxu0
      %347 = vmatprep.mubr.bf16.mxu0 0
      %348 = vmatmul.mubr.bf16.gmra.mxu0 %v293
      %v349 = vpop.f32.mrf.mxu0
      %v350 = vadd.f32 %v262, %v349
      %v351 = vpop.f32.mrf.mxu0
      %v352 = vpop.f32.mrf.mxu0
      %v353 = vadd.f32 %v262, %v352
      %v354 = vpop.f32.mrf.mxu0
      %355 = vmatprep.mubr.bf16.mxu0 0
      %356 = vmatmul.mubr.bf16.gmra.mxu0 %v296
      %v357 = vpop.f32.mrf.mxu0
      %v358 = vadd.f32 %v262, %v357
      %v359 = vpop.f32.mrf.mxu0
      %v360 = vpop.f32.mrf.mxu0
      %v361 = vadd.f32 %v262, %v360
      %v362 = vpop.f32.mrf.mxu0
      %363 = vmatprep.mubr.bf16.mxu0 0
      %364 = vmatmul.mubr.bf16.gmra.mxu0 %v299
      %v365 = vpop.f32.mrf.mxu0
      %v366 = vadd.f32 %v262, %v365
      %v367 = vpop.f32.mrf.mxu0
      %v368 = vpop.f32.mrf.mxu0
      %v369 = vadd.f32 %v262, %v368
      %v370 = vpop.f32.mrf.mxu0
      %371 = vmatprep.mubr.bf16.mxu0 0
      %372 = vmatmul.mubr.bf16.gmra.mxu0 %v302
      %v373 = vpop.f32.mrf.mxu0
      %v374 = vadd.f32 %v262, %v373
      %v375 = vpop.f32.mrf.mxu0
      %v376 = vpop.f32.mrf.mxu0
      %v377 = vadd.f32 %v262, %v376
      %v378 = vpop.f32.mrf.mxu0
      %379 = vmatprep.mubr.bf16.mxu0 0
      %380 = vmatmul.mubr.bf16.gmra.mxu0 %v305
      %v381 = vpop.f32.mrf.mxu0
      %v382 = vadd.f32 %v262, %v381
      %v383 = vpop.f32.mrf.mxu0
      %v384 = vpop.f32.mrf.mxu0
      %v385 = vadd.f32 %v262, %v384
      %v386 = vpop.f32.mrf.mxu0
      %387 = vdwg.mxu0
      %v388 = vxor.u32 %v342, 2147483648
      %v389 = vxor.u32 %v345, 2147483648
      %v390 = vxor.u32 %v350, 2147483648
      %v391 = vxor.u32 %v353, 2147483648
      %v392 = vxor.u32 %v358, 2147483648
      %v393 = vxor.u32 %v361, 2147483648
      %v394 = vxor.u32 %v366, 2147483648
      %v395 = vxor.u32 %v369, 2147483648
      %v396 = vxor.u32 %v374, 2147483648
      %v397 = vxor.u32 %v377, 2147483648
      %v398 = vxor.u32 %v382, 2147483648
      %v399 = vxor.u32 %v385, 2147483648
      %v400 = vmul.f32 %v388, 1.442695
      %v401 = vpow.pop %v400
      %v402 = vmul.f32 %v389, 1.442695
      %v403 = vpow.pop %v402
      %v404 = vmul.f32 %v390, 1.442695
      %v405 = vpow.pop %v404
      %v406 = vmul.f32 %v391, 1.442695
      %v407 = vpow.pop %v406
      %v408 = vmul.f32 %v392, 1.442695
      %v409 = vpow.pop %v408
      %v410 = vmul.f32 %v393, 1.442695
      %v411 = vpow.pop %v410
      %v412 = vmul.f32 %v394, 1.442695
      %v413 = vpow.pop %v412
      %v414 = vmul.f32 %v395, 1.442695
      %v415 = vpow.pop %v414
      %v416 = vmul.f32 %v396, 1.442695
      %v417 = vpow.pop %v416
      %v418 = vmul.f32 %v397, 1.442695
      %v419 = vpow.pop %v418
      %v420 = vmul.f32 %v398, 1.442695
      %v421 = vpow.pop %v420
      %v422 = vmul.f32 %v399, 1.442695
      %v423 = vpow.pop %v422
      %v424 = vadd.f32 %v401, 1.0
      %v425 = vadd.f32 %v403, 1.0
      %v426 = vadd.f32 %v405, 1.0
      %v427 = vadd.f32 %v407, 1.0
      %v428 = vadd.f32 %v409, 1.0
      %v429 = vadd.f32 %v411, 1.0
      %v430 = vadd.f32 %v413, 1.0
      %v431 = vadd.f32 %v415, 1.0
      %v432 = vadd.f32 %v417, 1.0
      %v433 = vadd.f32 %v419, 1.0
      %v434 = vadd.f32 %v421, 1.0
      %v435 = vadd.f32 %v423, 1.0
      %v436 = vrcp.pop %v424
      %v437 = vmul.f32 1.0, %v436
      %v438 = vrcp.pop %v425
      %v439 = vmul.f32 1.0, %v438
      %v440 = vrcp.pop %v426
      %v441 = vmul.f32 1.0, %v440
      %v442 = vrcp.pop %v427
      %v443 = vmul.f32 1.0, %v442
      %v444 = vrcp.pop %v428
      %v445 = vmul.f32 1.0, %v444
      %v446 = vrcp.pop %v429
      %v447 = vmul.f32 1.0, %v446
      %v448 = vrcp.pop %v430
      %v449 = vmul.f32 1.0, %v448
      %v450 = vrcp.pop %v431
      %v451 = vmul.f32 1.0, %v450
      %v452 = vrcp.pop %v432
      %v453 = vmul.f32 1.0, %v452
      %v454 = vrcp.pop %v433
      %v455 = vmul.f32 1.0, %v454
      %v456 = vrcp.pop %v434
      %v457 = vmul.f32 1.0, %v456
      %v458 = vrcp.pop %v435
      %v459 = vmul.f32 1.0, %v458
      %v460 = vmul.f32 %v231, %v437
      %v461 = vmul.f32 %v232, %v439
      %v462 = vmul.f32 %v233, %v441
      %v463 = vmul.f32 %v234, %v443
      %v464 = vmul.f32 %v235, %v445
      %v465 = vmul.f32 %v236, %v447
      %v466 = vmul.f32 %v237, %v449
      %v467 = vmul.f32 %v238, %v451
      %v468 = vmul.f32 %v239, %v453
      %v469 = vmul.f32 %v240, %v455
      %v470 = vmul.f32 %v241, %v457
      %v471 = vmul.f32 %v242, %v459
      %472 = vst.msk [vmem:[%s228] sm:$0xff] %vm288, %v460
      %473 = vst.msk [vmem:[%s228 + $0x8] sm:$0xff] %vm288, %v461
      %474 = vst.msk [vmem:[%s228 + $0x10] sm:$0xff] %vm288, %v462
      %475 = vst.msk [vmem:[%s228 + $0x18] sm:$0xff] %vm288, %v463
      %476 = vst.msk [vmem:[%s228 + $0x20] sm:$0xff] %vm288, %v464
      %477 = vst.msk [vmem:[%s228 + $0x28] sm:$0xff] %vm288, %v465
      %478 = vst.msk [vmem:[%s228 + $0x30] sm:$0xff] %vm288, %v466
      %479 = vst.msk [vmem:[%s228 + $0x38] sm:$0xff] %vm288, %v467
      %480 = vst.msk [vmem:[%s228 + $0x40] sm:$0xff] %vm288, %v468
      %481 = vst.msk [vmem:[%s228 + $0x48] sm:$0xff] %vm288, %v469
      %482 = vst.msk [vmem:[%s228 + $0x50] sm:$0xff] %vm288, %v470
      %483 = vst.msk [vmem:[%s228 + $0x58] sm:$0xff] %vm288, %v471
      %s484 = smul.u32 12, %s18
      %p485 = scmp.lt.s32.totalorder %s19, 1
      %s486 = scalar_select %p485, %s19, 1
      %p487 = scmp.lt.s32.totalorder %s484, 11
      %s488 = scalar_select %p487, %s484, 11
      %s489 = smul.addr %s486, 12
      %s490 = sadd.s32 %s488, %s489
      %s491 = smul.addr %s490, 8
      %s492 = scalar_lea.vmem %s3, %s491
      // Predicated region
      $region33: #{tpu_custom_call.1} parent=31 // pred_check
        %p493 = pneg %p124
      $region34: #{tpu_custom_call.1} parent=31 // pred_check_branch
        %495 = sbr.rel (%p493) target = $region36
      $region35: #{tpu_custom_call.1} parent=31 // pred_region
        %s496 = smul.u32 12, %s18
      $region36: #{tpu_custom_call.1} parent=31 // pred_fallthru
        _
    $region32: #{tpu_custom_call.1} parent=5 // pred_fallthru
      _
    %p497 = scmp.le.s32.totalorder 2, %s9
    // Predicated region
    $region37: #{tpu_custom_call.1} parent=5 // pred_check
      %p498 = pneg %p497
    $region38: #{tpu_custom_call.1} parent=5 // pred_check_branch
      %500 = sbr.rel (%p498) target = $region40
    $region39: #{tpu_custom_call.1} parent=5 // pred_region
      %s501 = ssub.s32 %s9, 2
      // Predicated region
      $region41: #{tpu_custom_call.1} parent=39 // pred_check
        %p502 = pneg %p130
      $region42: #{tpu_custom_call.1} parent=39 // pred_check_branch
        %504 = sbr.rel (%p502) target = $region44
      $region43: #{tpu_custom_call.1} parent=39 // pred_region
        %s505 = smul.u32 12, %s20
        %p506 = scmp.lt.s32.totalorder %s21, 1
        %s507 = scalar_select %p506, %s21, 1
        %p508 = scmp.lt.s32.totalorder %s505, 11
        %s509 = scalar_select %p508, %s505, 11
        %s510 = smul.addr %s507, 12
        %s511 = sadd.s32 %s509, %s510
        %s512 = smul.addr %s511, 8
        %s513 = scalar_lea.vmem %s3, %s512
      $region44: #{tpu_custom_call.1} parent=39 // pred_fallthru
        _
    $region40: #{tpu_custom_call.1} parent=5 // pred_fallthru
      _
  $region6: #{tpu_custom_call.1} parent=0 // loop_footer
    %s13 = sadd.s32 1, %s9
  $region7: #{tpu_custom_call.1} parent=0 // loop_footer_branch
    %8 = sbr.rel target = $region3
  $region8: #{tpu_custom_call.1} parent=0 // loop_exit
    _

</llo_original>
